<compile_context>
chip_gen: v5e
topology: v5e:2x2
jax: 0.10.0
libtpu: 0.0.40
codegen_flags: <defaults>
</compile_context>

<pallas_src>
import jax
import jax.numpy as jnp
from jax.experimental import pallas as pl
from jax.experimental.pallas import tpu as pltpu


LANE = 128        # TPU lane width (last dim)
SUBLANE = 8       # TPU sublane width (second-to-last dim)
MIN_ROWS_SPLIT = 1024   # split the grid in two (v7x megacore) only above this row count


def _round_up(x: int, m: int) -> int:
    return ((x + m - 1) // m) * m


def _cdiv(a: int, b: int) -> int:
    return -(-a // b)


def head_kernel(x_ref, w1_ref, b1_ref, w2_ref, b2_ref, o_ref):
    # x_ref:  (tm, H)   features tile, original dtype (cast to MXU dtype in-kernel)
    # w1_ref: (H, Hp)   bf16 dense weight (transposed, output dim zero-padded)
    # b1_ref: (1, Hp)   f32  dense bias (zero-padded)
    # w2_ref: (Hp, Lp)  bf16 out_proj weight (transposed, zero-padded)
    # b2_ref: (1, Lp)   f32  out_proj bias (zero-padded)
    # o_ref:  (tm, Lp)  bf16 logits tile (lane-dense, sliced back to L outside)
    x = x_ref[...].astype(w1_ref.dtype)              # in-kernel cast; VPU has slack
    h = jnp.dot(x, w1_ref[...],
                preferred_element_type=jnp.float32) + b1_ref[...]
    h = jnp.tanh(h)                                  # f32 EUP (safe on v5e too)
    y = jnp.dot(h.astype(w2_ref.dtype), w2_ref[...],
                preferred_element_type=jnp.float32) + b2_ref[...]
    o_ref[...] = y.astype(o_ref.dtype)


def model_head(features, w_dense, b_dense, w_out, b_out, *,
               tm=2048, dot_dtype=jnp.bfloat16, out_dtype=jnp.bfloat16):
    """features: [B, S, H]. Weights stored (in, out). Returns logits [B, S, num_labels]."""
    B, S, H = features.shape
    L = w_out.shape[1]
    M = B * S

    # Pad the *internal* hidden width and the output width to full lane multiples so the
    # intermediate h and the HBM output are lane-dense. x stays unpadded along H.
    Hp = _round_up(max(H, LANE), LANE)
    Lp = _round_up(max(L, LANE), LANE)

    # Row tiling: large tile to amortize per-grid-step overhead, clamped to the
    # (sublane-rounded) row count. If that would leave a single grid step while there is
    # plenty of work, split in two so v7x's second TensorCore is used ("parallel" axis).
    tm_eff = min(tm, _round_up(M, SUBLANE))
    if M >= MIN_ROWS_SPLIT and _cdiv(M, tm_eff) < 2:
        tm_eff = _round_up(_cdiv(M, 2), SUBLANE)
    Mp = _round_up(M, tm_eff)
    grid = Mp // tm_eff

    # Activations: reshape is free; only pad rows (zeros, dropped after the call).
    # No host-side dtype cast and no H padding -> no extra HBM pass over x.
    x2d = features.reshape(M, H)
    if Mp != M:
        x2d = jnp.pad(x2d, ((0, Mp - M), (0, 0)))

    # Weights/biases are tiny and resident; pad + cast on the host (exact zero padding).
    w1 = jnp.pad(w_dense.astype(dot_dtype), ((0, 0), (0, Hp - H)))
    b1 = jnp.pad(b_dense.astype(jnp.float32), (0, Hp - H)).reshape(1, Hp)
    w2 = jnp.pad(w_out.astype(dot_dtype), ((0, Hp - H), (0, Lp - L)))
    b2 = jnp.pad(b_out.astype(jnp.float32), (0, Lp - L)).reshape(1, Lp)

    x_bytes = jnp.dtype(x2d.dtype).itemsize
    w_bytes = jnp.dtype(dot_dtype).itemsize
    o_bytes = jnp.dtype(out_dtype).itemsize

    cost = pl.CostEstimate(
        flops=2 * Mp * Hp * (H + Lp),
        transcendentals=Mp * Hp,
        bytes_accessed=(Mp * H * x_bytes            # x
                        + H * Hp * w_bytes          # w1
                        + Hp * Lp * w_bytes         # w2
                        + (Hp + Lp) * 4             # biases
                        + Mp * Lp * o_bytes),       # output
    )

    # Scoped-VMEM budget: double-buffered x/out tiles + resident weights + f32/bf16
    # intermediates. Only set an explicit limit when we approach v5e's 16 MiB default;
    # cap at v7x's 64 MiB physical VMEM.
    vmem_need = (2 * tm_eff * H * x_bytes
                 + 2 * tm_eff * Lp * o_bytes
                 + 2 * (H * Hp + Hp * Lp) * w_bytes
                 + 2 * (Hp + Lp) * 4
                 + 3 * tm_eff * Hp * 4)             # h (f32) + bf16 copy headroom
    compiler_kwargs = dict(dimension_semantics=("parallel",))
    if vmem_need > 12 * 1024 * 1024:
        compiler_kwargs["vmem_limit_bytes"] = min(int(vmem_need * 2), 64 * 1024 * 1024)

    out = pl.pallas_call(
        head_kernel,
        out_shape=jax.ShapeDtypeStruct((Mp, Lp), out_dtype),
        grid_spec=pltpu.PrefetchScalarGridSpec(
            num_scalar_prefetch=0,
            grid=(grid,),
            in_specs=[
                pl.BlockSpec((tm_eff, H), lambda i: (i, 0)),   # x row tile (unpadded H)
                pl.BlockSpec((H, Hp),     lambda i: (0, 0)),   # dense weight (resident)
                pl.BlockSpec((1, Hp),     lambda i: (0, 0)),   # dense bias
                pl.BlockSpec((Hp, Lp),    lambda i: (0, 0)),   # out_proj weight (resident)
                pl.BlockSpec((1, Lp),     lambda i: (0, 0)),   # out_proj bias
            ],
            out_specs=pl.BlockSpec((tm_eff, Lp), lambda i: (i, 0)),
        ),
        compiler_params=pltpu.CompilerParams(**compiler_kwargs),
        cost_estimate=cost,
    )(x2d, w1, b1, w2, b2)

    return out[:M, :L].reshape(B, S, L).astype(features.dtype)


if __name__ == "__main__":
    # Small shapes consistent with the module: hidden_size=32, num_labels=4.
    B, S, H, L = 2, 8, 32, 4

    key = jax.random.PRNGKey(0)
    k_x, k_w1, k_b1, k_w2, k_b2 = jax.random.split(key, 5)

    features = jax.random.normal(k_x, (B, S, H), dtype=jnp.float32)

    # PyTorch Linear stores (out, in); we store the transpose (in, out) for x @ W.
    w_dense = jax.random.normal(k_w1, (H, H), dtype=jnp.float32) * 0.05
    b_dense = jax.random.normal(k_b1, (H,), dtype=jnp.float32) * 0.01
    w_out   = jax.random.normal(k_w2, (H, L), dtype=jnp.float32) * 0.05
    b_out   = jax.random.normal(k_b2, (L,), dtype=jnp.float32) * 0.01

    logits = model_head(features, w_dense, b_dense, w_out, b_out)
    jax.block_until_ready(logits)

    # Pure-JAX f32 reference (dropout is identity in eval mode). Kernel uses bf16 MXU
    # inputs with f32 accumulation and a bf16 output store, so allow a small tolerance.
    ref = jnp.tanh(features @ w_dense + b_dense) @ w_out + b_out
    assert logits.shape == (B, S, L)
    assert jnp.allclose(logits, ref, atol=2e-2, rtol=2e-2), "mismatch vs reference"

    print("KERNEL_OK")
</pallas_src>

<mosaic_0001>
module attributes {stable_mosaic.version = 11 : i64} {
  func.func @head_kernel(%arg0: i32, %arg1: memref<16x32xf32, #tpu.memory_space<vmem>>, %arg2: memref<32x128xbf16, #tpu.memory_space<vmem>>, %arg3: memref<1x128xf32, #tpu.memory_space<vmem>>, %arg4: memref<128x128xbf16, #tpu.memory_space<vmem>>, %arg5: memref<1x128xf32, #tpu.memory_space<vmem>>, %arg6: memref<16x128xbf16, #tpu.memory_space<vmem>>) attributes {dimension_semantics = [#tpu.dimension_semantics<parallel>], iteration_bounds = array<i64: 1>, scalar_prefetch = 0 : i64, scratch_operands = 0 : i64, tpu.core_type = #tpu.core_type<tc>, window_params = [{transform_indices = @transform_0, window_bounds = array<i64: 16, 32>}, {pipeline_mode = #tpu.pipeline_mode<synchronous>, transform_indices = @transform_1, window_bounds = array<i64: 32, 128>}, {pipeline_mode = #tpu.pipeline_mode<synchronous>, transform_indices = @transform_2, window_bounds = array<i64: 1, 128>}, {pipeline_mode = #tpu.pipeline_mode<synchronous>, transform_indices = @transform_3, window_bounds = array<i64: 128, 128>}, {pipeline_mode = #tpu.pipeline_mode<synchronous>, transform_indices = @transform_4, window_bounds = array<i64: 1, 128>}, {transform_indices = @transform_5, window_bounds = array<i64: 16, 128>}]} {
    %c0 = arith.constant 0 : index
    %c0_0 = arith.constant 0 : index
    %0 = vector.load %arg1[%c0, %c0_0] : memref<16x32xf32, #tpu.memory_space<vmem>>, vector<16x32xf32>
    %1 = arith.truncf %0 : vector<16x32xf32> to vector<16x32xbf16>
    %c0_1 = arith.constant 0 : index
    %c0_2 = arith.constant 0 : index
    %2 = vector.load %arg2[%c0_1, %c0_2] : memref<32x128xbf16, #tpu.memory_space<vmem>>, vector<32x128xbf16>
    %cst = arith.constant dense<0.000000e+00> : vector<16x128xf32>
    %3 = tpu.matmul %1, %2, %cst {dimension_numbers = #tpu.dot_dimension_numbers<[1], [0], [0], [1], [0, 0, 1, 1], [], []>} : vector<16x32xbf16>, vector<32x128xbf16>, vector<16x128xf32> -> vector<16x128xf32>
    %c0_3 = arith.constant 0 : index
    %c0_4 = arith.constant 0 : index
    %4 = vector.load %arg3[%c0_3, %c0_4] : memref<1x128xf32, #tpu.memory_space<vmem>>, vector<1x128xf32>
    %5 = vector.broadcast %4 : vector<1x128xf32> to vector<16x128xf32>
    %6 = arith.addf %3, %5 : vector<16x128xf32>
    %7 = math.tanh %6 : vector<16x128xf32>
    %8 = arith.truncf %7 : vector<16x128xf32> to vector<16x128xbf16>
    %c0_5 = arith.constant 0 : index
    %c0_6 = arith.constant 0 : index
    %9 = vector.load %arg4[%c0_5, %c0_6] : memref<128x128xbf16, #tpu.memory_space<vmem>>, vector<128x128xbf16>
    %cst_7 = arith.constant dense<0.000000e+00> : vector<16x128xf32>
    %10 = tpu.matmul %8, %9, %cst_7 {dimension_numbers = #tpu.dot_dimension_numbers<[1], [0], [0], [1], [0, 0, 1, 1], [], []>} : vector<16x128xbf16>, vector<128x128xbf16>, vector<16x128xf32> -> vector<16x128xf32>
    %c0_8 = arith.constant 0 : index
    %c0_9 = arith.constant 0 : index
    %11 = vector.load %arg5[%c0_8, %c0_9] : memref<1x128xf32, #tpu.memory_space<vmem>>, vector<1x128xf32>
    %12 = vector.broadcast %11 : vector<1x128xf32> to vector<16x128xf32>
    %13 = arith.addf %10, %12 : vector<16x128xf32>
    %14 = arith.truncf %13 : vector<16x128xf32> to vector<16x128xbf16>
    %c0_10 = arith.constant 0 : index
    %c0_11 = arith.constant 0 : index
    %15 = vector.load %arg6[%c0_10, %c0_11] : memref<16x128xbf16, #tpu.memory_space<vmem>>, vector<16x128xbf16>
    tpu.vector_store %arg6[%c0_10, %c0_11], %14 {strides = array<i32>} : memref<16x128xbf16, #tpu.memory_space<vmem>>, vector<16x128xbf16>,
    return
  }
  func.func @transform_0(%arg0: i32) -> (i32, i32) {
    %c0_i32 = arith.constant 0 : i32
    %c0_i32_0 = arith.constant 0 : i32
    return %arg0, %c0_i32 : i32, i32
  }
  func.func @transform_1(%arg0: i32) -> (i32, i32) {
    %c0_i32 = arith.constant 0 : i32
    %c0_i32_0 = arith.constant 0 : i32
    %c0_i32_1 = arith.constant 0 : i32
    return %c0_i32, %c0_i32_0 : i32, i32
  }
  func.func @transform_2(%arg0: i32) -> (i32, i32) {
    %c0_i32 = arith.constant 0 : i32
    %c0_i32_0 = arith.constant 0 : i32
    %c0_i32_1 = arith.constant 0 : i32
    return %c0_i32, %c0_i32_0 : i32, i32
  }
  func.func @transform_3(%arg0: i32) -> (i32, i32) {
    %c0_i32 = arith.constant 0 : i32
    %c0_i32_0 = arith.constant 0 : i32
    %c0_i32_1 = arith.constant 0 : i32
    return %c0_i32, %c0_i32_0 : i32, i32
  }
  func.func @transform_4(%arg0: i32) -> (i32, i32) {
    %c0_i32 = arith.constant 0 : i32
    %c0_i32_0 = arith.constant 0 : i32
    %c0_i32_1 = arith.constant 0 : i32
    return %c0_i32, %c0_i32_0 : i32, i32
  }
  func.func @transform_5(%arg0: i32) -> (i32, i32) {
    %c0_i32 = arith.constant 0 : i32
    %c0_i32_0 = arith.constant 0 : i32
    return %arg0, %c0_i32 : i32, i32
  }
}

</mosaic_0001>

<llo_original>
// kernel: tpu_custom_call.1
$region0: #{tpu_custom_call.1}
  #allocation0 [shape = 'u32[]', space=smem, size = 0x4, offset = 0x4, fixed_abs, tag = 'smem constant byte address 0x4 - core index']
  #allocation1 [shape = 'u32[72,128]{1,0:T(1,128)}', space=vmem, size = 0x9000, scoped, tag = 'internal scratch']
  %s0 = inlined_call_operand.hbm [shape: f32[16,32], index: 0, kind: input, shape index: {}]
  %s1 = inlined_call_operand.hbm [shape: bf16[32,128], index: 1, kind: input, shape index: {}]
  %s2 = inlined_call_operand.vmem [shape: f32[1,128], index: 2, kind: input, shape index: {}]
  %s3 = inlined_call_operand.hbm [shape: bf16[128,128], index: 3, kind: input, shape index: {}]
  %s4 = inlined_call_operand.vmem [shape: f32[1,128], index: 4, kind: input, shape index: {}]
  %s5 = inlined_call_operand.hbm [shape: bf16[16,128], index: 5, kind: output, shape index: {}]
  %s6 = sld [smem:[#allocation0]]
  $region42: #{tpu_custom_call.1} parent=0
    _
  %s8 = ssub.s32 1, %s6
  %s9 = scalar_select 0, %s8, %s6
  $region1: #{tpu_custom_call.1} parent=0
    #allocation2 [shape = 'u8[8192]{0}', space=vmem, size = 0x2000, scoped, tag = 'input window, operand 0, single buffered']
    #allocation3 [shape = 's32[1]{0}', space=sflag, size = 0x4, scoped, tag = 'scoped memory for tpu_custom_call.1']
    #allocation4 [shape = 's32[1]{0}', space=sflag, size = 0x4, scoped, tag = 'scoped memory for tpu_custom_call.1']
    #allocation5 [shape = 'u8[8192]{0}', space=vmem, size = 0x2000, scoped, tag = 'input window, operand 1, single buffered']
    #allocation6 [shape = 's32[1]{0}', space=sflag, size = 0x4, scoped, tag = 'scoped memory for tpu_custom_call.1']
    #allocation7 [shape = 'u8[32768]{0}', space=vmem, size = 0x8000, scoped, tag = 'input window, operand 3, single buffered']
    #allocation8 [shape = 'u8[4096]{0}', space=vmem, size = 0x1000, scoped, tag = 'output window, operand 0, single buffered']
    %10 = vsyncpa [#allocation3], 0
    %11 = vsyncpa [#allocation6], 0
    %12 = vsyncpa [#allocation4], 0
    // Predicated region
    $region2: #{tpu_custom_call.1} parent=1 // pred_check
      _
    $region3: #{tpu_custom_call.1} parent=1 // pred_check_branch
      %14 = sbr.rel (0) target = $region5
    $region4: #{tpu_custom_call.1} parent=1 // pred_region
      %16 = vsyncadd [#allocation3], 0
      %s17 = sshll.u32 %s0, 4
      %s18 = int_to_ptr.hbm [resolvable:$true] %s17
      %s19 = sshll.u32 [#allocation2], 4
      %s20 = int_to_ptr.vmem [resolvable:$true] %s19
      %25 = dma.hbm_to_vmem [thread:$0]  %s18, 256, %s20, [#allocation3], 128, 128, 8
    $region5: #{tpu_custom_call.1} parent=1 // pred_fallthru
      _
    // Predicated region
    $region6: #{tpu_custom_call.1} parent=1 // pred_check
      _
    $region7: #{tpu_custom_call.1} parent=1 // pred_check_branch
      %27 = sbr.rel (0) target = $region9
    $region8: #{tpu_custom_call.1} parent=1 // pred_region
      %29 = vsyncadd [#allocation6], 0
      %s30 = sshll.u32 %s1, 4
      %s31 = int_to_ptr.hbm [resolvable:$true] %s30
      %s32 = sshll.u32 [#allocation5], 4
      %s33 = int_to_ptr.vmem [resolvable:$true] %s32
      %38 = dma.hbm_to_vmem [thread:$0]  %s31, 256, %s33, [#allocation6], 64, 64, 4
    $region9: #{tpu_custom_call.1} parent=1 // pred_fallthru
      _
    // Predicated region
    $region10: #{tpu_custom_call.1} parent=1 // pred_check
      _
    $region11: #{tpu_custom_call.1} parent=1 // pred_check_branch
      %40 = sbr.rel (0) target = $region13
    $region12: #{tpu_custom_call.1} parent=1 // pred_region
      _
    $region13: #{tpu_custom_call.1} parent=1 // pred_fallthru
      _
    // Predicated region
    $region14: #{tpu_custom_call.1} parent=1 // pred_check
      _
    $region15: #{tpu_custom_call.1} parent=1 // pred_check_branch
      %42 = sbr.rel (0) target = $region17
    $region16: #{tpu_custom_call.1} parent=1 // pred_region
      %44 = vsyncadd [#allocation6], 0
      %s45 = sshll.u32 %s3, 4
      %s46 = int_to_ptr.hbm [resolvable:$true] %s45
      %s47 = sshll.u32 [#allocation7], 4
      %s48 = int_to_ptr.vmem [resolvable:$true] %s47
      %53 = dma.hbm_to_vmem [thread:$0]  %s46, 1024, %s48, [#allocation6], 64, 64, 4
    $region17: #{tpu_custom_call.1} parent=1 // pred_fallthru
      _
    // Predicated region
    $region18: #{tpu_custom_call.1} parent=1 // pred_check
      _
    $region19: #{tpu_custom_call.1} parent=1 // pred_check_branch
      %55 = sbr.rel (0) target = $region21
    $region20: #{tpu_custom_call.1} parent=1 // pred_region
      _
    $region21: #{tpu_custom_call.1} parent=1 // pred_fallthru
      _
    // Predicated region
    $region22: #{tpu_custom_call.1} parent=1 // pred_check
      _
    $region23: #{tpu_custom_call.1} parent=1 // pred_check_branch
      %57 = sbr.rel (0) target = $region25
    $region24: #{tpu_custom_call.1} parent=1 // pred_region
      %59 = dma.done [#allocation3], 256
    $region25: #{tpu_custom_call.1} parent=1 // pred_fallthru
      _
    // Predicated region
    $region26: #{tpu_custom_call.1} parent=1 // pred_check
      _
    $region27: #{tpu_custom_call.1} parent=1 // pred_check_branch
      %61 = sbr.rel (0) target = $region29
    $region28: #{tpu_custom_call.1} parent=1 // pred_region
      %63 = dma.done [#allocation6], 256
    $region29: #{tpu_custom_call.1} parent=1 // pred_fallthru
      _
    // Predicated region
    $region30: #{tpu_custom_call.1} parent=1 // pred_check
      _
    $region31: #{tpu_custom_call.1} parent=1 // pred_check_branch
      %65 = sbr.rel (0) target = $region33
    $region32: #{tpu_custom_call.1} parent=1 // pred_region
      %67 = dma.done [#allocation6], 1024
    $region33: #{tpu_custom_call.1} parent=1 // pred_fallthru
      _
    %v69 = vld [vmem:[#allocation2] sm:$0xff]
    %v70 = vld [vmem:[#allocation2 + $0x8] sm:$0xff]
    %v71 = vpack.c.bf16 %v70, %v69
    %v72 = vld [vmem:[#allocation5] sm:$0xf]
    %v73 = vld [vmem:[#allocation5 + $0x4] sm:$0xf]
    %v74 = vld [vmem:[#allocation5 + $0x8] sm:$0xf]
    %v75 = vld [vmem:[#allocation5 + $0xc] sm:$0xf]
    %v76 = vld [vmem:[%s2] sm:$0x1]
    %v78 = vperm.slane %v76, 0
    %v84 = vunpack.c.l.b16 %v72
    %v85 = vunpack.c.l.b16 %v73
    %v86 = vunpack.c.l.b16 %v74
    %v87 = vunpack.c.l.b16 %v75
    %v88 = vpack.c.b16 %v85, %v84
    %v89 = vpack.c.b16 %v87, %v86
    %vm92 = vcmask 261120
    %v94 = vsel %vm92, %v71, 0
    %96 = vmatpush.bf16.msra.mxu0 0
    %97 = vmatpush.bf16.msra.mxu0 0
    %98 = vmatpush.bf16.msra.mxu0 0
    %99 = vmatpush.bf16.msra.mxu0 0
    %100 = vmatpush.bf16.msra.mxu0 0
    %101 = vmatpush.bf16.msra.mxu0 0
    %102 = vmatpush.bf16.msra.mxu0 %v89
    %103 = vmatpush.bf16.msra.mxu0 %v88
    %104 = vmatmul.bf16.gmra.mxu0 %v94
    %v105 = vpop.f32.mrf.mxu0
    %v106 = vadd.f32 %v78, %v105
    %v107 = vpop.f32.mrf.mxu0
    %v108 = vadd.f32 %v78, %v107
    %109 = vdwg.mxu0
    %v110 = vtanh.pop %v106
    %v111 = vtanh.pop %v108
    %v112 = vpack.c.bf16 %v111, %v110
    %v113 = vld [vmem:[#allocation7] sm:$0xf]
    %v114 = vld [vmem:[#allocation7 + $0x4] sm:$0xf]
    %v115 = vld [vmem:[#allocation7 + $0x8] sm:$0xf]
    %v116 = vld [vmem:[#allocation7 + $0xc] sm:$0xf]
    %v117 = vld [vmem:[#allocation7 + $0x10] sm:$0xf]
    %v118 = vld [vmem:[#allocation7 + $0x14] sm:$0xf]
    %v119 = vld [vmem:[#allocation7 + $0x18] sm:$0xf]
    %v120 = vld [vmem:[#allocation7 + $0x1c] sm:$0xf]
    %v121 = vld [vmem:[#allocation7 + $0x20] sm:$0xf]
    %v122 = vld [vmem:[#allocation7 + $0x24] sm:$0xf]
    %v123 = vld [vmem:[#allocation7 + $0x28] sm:$0xf]
    %v124 = vld [vmem:[#allocation7 + $0x2c] sm:$0xf]
    %v125 = vld [vmem:[#allocation7 + $0x30] sm:$0xf]
    %v126 = vld [vmem:[#allocation7 + $0x34] sm:$0xf]
    %v127 = vld [vmem:[#allocation7 + $0x38] sm:$0xf]
    %v128 = vld [vmem:[#allocation7 + $0x3c] sm:$0xf]
    %v129 = vld [vmem:[%s4] sm:$0x1]
    %v131 = vperm.slane %v129, 0
    %v149 = vunpack.c.l.b16 %v113
    %v150 = vunpack.c.l.b16 %v114
    %v151 = vunpack.c.l.b16 %v115
    %v152 = vunpack.c.l.b16 %v116
    %v153 = vunpack.c.l.b16 %v117
    %v154 = vunpack.c.l.b16 %v118
    %v155 = vunpack.c.l.b16 %v119
    %v156 = vunpack.c.l.b16 %v120
    %v157 = vunpack.c.l.b16 %v121
    %v158 = vunpack.c.l.b16 %v122
    %v159 = vunpack.c.l.b16 %v123
    %v160 = vunpack.c.l.b16 %v124
    %v161 = vunpack.c.l.b16 %v125
    %v162 = vunpack.c.l.b16 %v126
    %v163 = vunpack.c.l.b16 %v127
    %v164 = vunpack.c.l.b16 %v128
    %v165 = vpack.c.b16 %v150, %v149
    %v166 = vpack.c.b16 %v152, %v151
    %v167 = vpack.c.b16 %v154, %v153
    %v168 = vpack.c.b16 %v156, %v155
    %v169 = vpack.c.b16 %v158, %v157
    %v170 = vpack.c.b16 %v160, %v159
    %v171 = vpack.c.b16 %v162, %v161
    %v172 = vpack.c.b16 %v164, %v163
    %181 = vmatpush.bf16.msra.mxu0 %v172
    %182 = vmatpush.bf16.msra.mxu0 %v171
    %183 = vmatpush.bf16.msra.mxu0 %v170
    %184 = vmatpush.bf16.msra.mxu0 %v169
    %185 = vmatpush.bf16.msra.mxu0 %v168
    %186 = vmatpush.bf16.msra.mxu0 %v167
    %187 = vmatpush.bf16.msra.mxu0 %v166
    %188 = vmatpush.bf16.msra.mxu0 %v165
    %189 = vmatmul.bf16.gmra.mxu0 %v112
    %v190 = vpop.f32.mrf.mxu0
    %v191 = vadd.f32 %v131, %v190
    %v192 = vpop.f32.mrf.mxu0
    %v193 = vadd.f32 %v131, %v192
    %194 = vdwg.mxu0
    %v195 = vpack.c.bf16 %v191, %v191
    %v196 = vpack.c.bf16 %v193, %v193
    %197 = vst [vmem:[#allocation8] sm:$0xf] %v195
    %198 = vst [vmem:[#allocation8 + $0x4] sm:$0xf] %v196
    // Predicated region
    $region34: #{tpu_custom_call.1} parent=1 // pred_check
      _
    $region35: #{tpu_custom_call.1} parent=1 // pred_check_branch
      %200 = sbr.rel (0) target = $region37
    $region36: #{tpu_custom_call.1} parent=1 // pred_region
      %202 = vsyncadd [#allocation4], 0
      %s203 = sshll.u32 [#allocation8], 4
      %s204 = int_to_ptr.vmem [resolvable:$true] %s203
      %s205 = sshll.u32 %s5, 4
      %s206 = int_to_ptr.hbm [resolvable:$true] %s205
      %211 = dma.vmem_to_hbm [thread:$0]  %s204, 128, %s206, [#allocation4], 64, 64, 4
    $region37: #{tpu_custom_call.1} parent=1 // pred_fallthru
      _
    // Predicated region
    $region38: #{tpu_custom_call.1} parent=1 // pred_check
      _
    $region39: #{tpu_custom_call.1} parent=1 // pred_check_branch
      %213 = sbr.rel (0) target = $region41
    $region40: #{tpu_custom_call.1} parent=1 // pred_region
      %215 = dma.done [#allocation4], 128
    $region41: #{tpu_custom_call.1} parent=1 // pred_fallthru
      _
    %216 = vsyncpa [#allocation3], 1
    %217 = vsyncpa [#allocation6], 1
    %218 = vsyncpa [#allocation4], 1

</llo_original>
